<compile_context>
chip_gen: v6e
topology: v6e:2x2x1
jax: 0.10.0
libtpu: 0.0.40
codegen_flags: <defaults>
</compile_context>

<pallas_src>
import math
from functools import partial

import jax
import jax.numpy as jnp
import numpy as np
from jax import lax
from jax.experimental import pallas as pl
from jax.experimental.pallas import tpu as pltpu


# ----------------------------- in-kernel helpers -----------------------------

def _layernorm(x, w, b, eps=1e-5):
    mu = jnp.mean(x, axis=-1, keepdims=True)
    var = jnp.mean((x - mu) ** 2, axis=-1, keepdims=True)
    return (x - mu) * lax.rsqrt(var + eps) * w + b


def _gelu_tanh(x):
    return 0.5 * x * (1.0 + jnp.tanh(math.sqrt(2.0 / math.pi) * (x + 0.044715 * x ** 3)))


# ------------------------ kernel 1: LN1 + fused QKV ---------------------------
# Rotary (head-indexed) and the 1/sqrt(hd) score scale are pre-folded into the weight columns by
# the wrapper, so this kernel is a plain LayerNorm + matmul with a lane-dense (tq, 3C) output.

def qkv_kernel(x_ref, ln1w_ref, ln1b_ref, w_ref, b_ref, qkv_ref, *, compute_dtype):
    h1 = _layernorm(x_ref[...], ln1w_ref[...], ln1b_ref[...])
    qkv = jnp.dot(h1.astype(compute_dtype), w_ref[...],
                  preferred_element_type=jnp.float32) + b_ref[...]
    qkv_ref[...] = qkv.astype(qkv_ref.dtype)


# -------- kernel 2: flash attention + out-proj + residual + LN2 + MLP ---------

def block_kernel(x_ref, q_ref, k_ref, v_ref,
                 ln2w_ref, ln2b_ref,
                 wproj_ref, bproj_ref, wfc_ref, bfc_ref, wp2_ref, bp2_ref,
                 o_ref,
                 *, n_head, tq, tk, compute_dtype, approx_recip):
    cd = compute_dtype
    T = k_ref.shape[1]
    hd = k_ref.shape[2]
    qi = pl.program_id(1)
    q_start = pl.multiple_of(qi * tq, tq)

    q3 = q_ref[...]                          # (nh, tq, hd), already rotated & pre-scaled

    # ---- online-softmax attention over key blocks; blocks above the diagonal are skipped ----
    nkb = (q_start + tq + tk - 1) // tk      # number of key blocks intersecting the causal window

    def kv_step(kb, carry):
        m, l, acc = carry
        ks = pl.multiple_of(kb * tk, tk)
        k_blk = k_ref[:, pl.ds(ks, tk), :]                           # (nh, tk, hd)
        v_blk = v_ref[:, pl.ds(ks, tk), :]
        s = jnp.einsum('hqd,hkd->hqk', q3, k_blk,
                       preferred_element_type=jnp.float32)           # (nh, tq, tk) f32
        rows = lax.broadcasted_iota(jnp.int32, (tq, tk), 0) + q_start
        cols = lax.broadcasted_iota(jnp.int32, (tq, tk), 1) + ks
        # additive causal bias; the diagonal is never masked, so max-subtraction keeps exp finite
        s = s + jnp.where(rows >= cols, jnp.float32(0.0), jnp.float32(-1e30))[None]
        m_new = jnp.maximum(m, jnp.max(s, axis=-1, keepdims=True))
        alpha = jnp.exp(m - m_new)
        p = jnp.exp(s - m_new)
        l_new = alpha * l + jnp.sum(p, axis=-1, keepdims=True)
        acc_new = alpha * acc + jnp.einsum('hqk,hkd->hqd', p.astype(cd), v_blk,
                                           preferred_element_type=jnp.float32)
        return m_new, l_new, acc_new

    m0 = jnp.full((n_head, tq, 1), -1e30, jnp.float32)
    l0 = jnp.zeros((n_head, tq, 1), jnp.float32)
    a0 = jnp.zeros((n_head, tq, hd), jnp.float32)
    _, l, acc = lax.fori_loop(0, nkb, kv_step, (m0, l0, a0))

    if approx_recip:
        y3 = acc * pl.reciprocal(l, approx=True)      # EUP reciprocal on the bf16 perf path
    else:
        y3 = acc / l                                  # exact divide on the f32 reference path

    # merge heads into one lane-dense (tq, C) operand for the output projection
    # (single value concatenate; no per-head masked stores to a VMEM scratch slab).
    y = jnp.concatenate([y3[h] for h in range(n_head)], axis=-1)

    x_t = x_ref[...]                                                          # (tq, C) f32
    attn_out = jnp.dot(y.astype(cd), wproj_ref[...],
                       preferred_element_type=jnp.float32) + bproj_ref[...]
    x1 = x_t + attn_out

    h2 = _layernorm(x1, ln2w_ref[...], ln2b_ref[...])
    hfc = jnp.dot(h2.astype(cd), wfc_ref[...],
                  preferred_element_type=jnp.float32) + bfc_ref[...]
    hfc = _gelu_tanh(hfc)
    mlp_out = jnp.dot(hfc.astype(cd), wp2_ref[...],
                      preferred_element_type=jnp.float32) + bp2_ref[...]

    o_ref[...] = (x1 + mlp_out).astype(o_ref.dtype)


# --------------------------------- wrapper ------------------------------------

def _fold_rotary(w, b, sin, cos, n_head, scale=1.0):
    """Fold the head-indexed rotary rotation (and an optional scalar scale) into the columns of a
    (C_in, C_out) projection whose outputs are laid out head-major.

    out[d] = in[d]*cos[h,d] + sign(d)*in[(d+hd/2)%hd]*sin[h,d]  ==  in @ M_h  with
    M_h[e, d] = cos[h,d]*(e==d) + sign(d)*sin[h,d]*(e==(d+hd/2)%hd).
    """
    c_out = w.shape[1]
    hd = c_out // n_head
    half = hd // 2
    eye = jnp.eye(hd, dtype=jnp.float32)
    perm = jnp.roll(eye, half, axis=0)               # perm[e, d] = 1 iff e == (d + half) % hd
    sign = jnp.concatenate([-jnp.ones((half,), jnp.float32), jnp.ones((half,), jnp.float32)])
    M = eye[None] * cos[:, None, :] + perm[None] * (sign[None, None, :] * sin[:, None, :])
    M = M * scale                                    # (n_head, hd, hd)
    w_f = jnp.einsum('xhe,hed->xhd', w.reshape(-1, n_head, hd).astype(jnp.float32), M)
    b_f = jnp.einsum('xhe,hed->xhd', b.reshape(-1, n_head, hd).astype(jnp.float32), M)
    return w_f.reshape(w.shape), b_f.reshape(b.shape)


def _vmem_limit_bytes():
    # Leave ~25% headroom for compiler internal scratch; never ask for more than ~96 MiB.
    # -> ~48 MiB on v7x (64 MiB physical per TC), ~96 MiB on v5e/v6e (128 MiB physical).
    try:
        phys = int(pltpu.get_tpu_info().vmem_capacity_bytes)
    except Exception:
        phys = 64 * 1024 * 1024
    return min(phys * 3 // 4, 96 * 1024 * 1024)


def gpt2_block(x, params, n_head, *, tq=None, tk=None, compute_dtype=jnp.bfloat16):
    B, T, C = x.shape
    hd = C // n_head
    if tq is None:
        tq = min(T, 128)          # sweep up to 256 on v6e (128 MiB VMEM, 2x256^2 MXU)
    if tk is None:
        tk = min(T, 512)
    assert T % tq == 0 and tq % 8 == 0, "query tile must divide T and be sublane-aligned"
    assert T % tk == 0 and tk % 8 == 0, "key tile must divide T and be sublane-aligned"
    nqt = T // tq
    f32 = jnp.float32
    cd = compute_dtype
    cd_bytes = np.dtype(cd).itemsize
    approx_recip = np.dtype(cd) != np.dtype(np.float32)

    sin = params["sin"].astype(f32)       # (n_head, hd): indexed by HEAD (reference semantics)
    cos = params["cos"].astype(f32)
    w_attn = params["w_attn"].astype(f32)
    b_attn = params["b_attn"].astype(f32)

    # Fold rotary into the Q / K columns of c_attn; fold the 1/sqrt(hd) score scale into Q.
    wq_f, bq_f = _fold_rotary(w_attn[:, :C], b_attn[:, :C], sin, cos, n_head,
                              scale=1.0 / math.sqrt(hd))
    wk_f, bk_f = _fold_rotary(w_attn[:, C:2 * C], b_attn[:, C:2 * C], sin, cos, n_head)
    w_qkv = jnp.concatenate([wq_f, wk_f, w_attn[:, 2 * C:]], axis=1).astype(cd)
    b_qkv = jnp.concatenate([bq_f, bk_f, b_attn[:, 2 * C:]], axis=1)          # f32

    ln1w = params["ln1_w"].astype(f32); ln1b = params["ln1_b"].astype(f32)
    ln2w = params["ln2_w"].astype(f32); ln2b = params["ln2_b"].astype(f32)
    wproj = params["w_proj"].astype(cd); bproj = params["b_proj"].astype(f32)
    wfc = params["w_fc"].astype(cd);     bfc = params["b_fc"].astype(f32)
    wp2 = params["w_proj2"].astype(cd);  bp2 = params["b_proj2"].astype(f32)

    vmem_limit = _vmem_limit_bytes()

    def run(single_buffer):
        def const_spec(p):
            nd = p.ndim
            if single_buffer:
                return pl.BlockSpec(p.shape, lambda b, i, _nd=nd: (0,) * _nd,
                                    pipeline_mode=pl.Buffered(1))
            return pl.BlockSpec(p.shape, lambda b, i, _nd=nd: (0,) * _nd)

        # ---- kernel 1: LN1 + fused QKV projection (rotary pre-folded into weights) ----
        qkv_consts = [ln1w, ln1b, w_qkv, b_qkv]
        qkv = pl.pallas_call(
            partial(qkv_kernel, compute_dtype=cd),
            out_shape=jax.ShapeDtypeStruct((B, T, 3 * C), cd),
            grid=(B, nqt),
            in_specs=[pl.BlockSpec((pl.Squeezed(), tq, C), lambda b, i: (b, i, 0))]
                     + [const_spec(p) for p in qkv_consts],
            out_specs=pl.BlockSpec((pl.Squeezed(), tq, 3 * C), lambda b, i: (b, i, 0)),
            compiler_params=pltpu.CompilerParams(
                dimension_semantics=("parallel", "parallel"),
                vmem_limit_bytes=vmem_limit),
            cost_estimate=pl.CostEstimate(
                flops=int(6 * B * T * C * C),
                transcendentals=int(B * T),
                bytes_accessed=int(x.size * 4 + w_qkv.size * cd_bytes + B * T * 3 * C * cd_bytes)),
        )(x, *qkv_consts)

        # Head split is wrapper-side layout plumbing (kernel output stays lane-dense):
        q, k, v = jnp.split(qkv, 3, axis=-1)

        def to_heads(z):
            return z.reshape(B, T, n_head, hd).transpose(0, 2, 1, 3)   # (B, nh, T, hd)

        q3, k3, v3 = to_heads(q), to_heads(k), to_heads(v)

        # ---- kernel 2: flash attention + out-proj + residual + LN2 + MLP + residual ----
        blk_consts = [ln2w, ln2b, wproj, bproj, wfc, bfc, wp2, bp2]
        in_specs = [
            pl.BlockSpec((pl.Squeezed(), tq, C), lambda b, i: (b, i, 0)),              # x (resid)
            pl.BlockSpec((pl.Squeezed(), n_head, tq, hd), lambda b, i: (b, 0, i, 0)),  # q tile
            pl.BlockSpec((pl.Squeezed(), n_head, T, hd), lambda b, i: (b, 0, 0, 0)),   # k (full T)
            pl.BlockSpec((pl.Squeezed(), n_head, T, hd), lambda b, i: (b, 0, 0, 0)),   # v (full T)
        ] + [const_spec(p) for p in blk_consts]

        flops = int(18 * B * T * C * C + 2 * B * T * T * C)
        transcendentals = int(B * n_head * T * T // 2 + 4 * B * T * C)
        bytes_accessed = int(2 * x.size * 4 + 3 * B * T * C * cd_bytes
                             + sum(p.size * p.dtype.itemsize for p in blk_consts))

        return pl.pallas_call(
            partial(block_kernel, n_head=n_head, tq=tq, tk=tk,
                    compute_dtype=cd, approx_recip=approx_recip),
            out_shape=jax.ShapeDtypeStruct((B, T, C), x.dtype),
            grid=(B, nqt),
            in_specs=in_specs,
            out_specs=pl.BlockSpec((pl.Squeezed(), tq, C), lambda b, i: (b, i, 0)),
            compiler_params=pltpu.CompilerParams(
                dimension_semantics=("parallel", "parallel"),
                vmem_limit_bytes=vmem_limit),
            cost_estimate=pl.CostEstimate(flops=flops, transcendentals=transcendentals,
                                          bytes_accessed=bytes_accessed),
        )(x, q3, k3, v3, *blk_consts)

    try:
        return run(single_buffer=True)
    except Exception:
        # pipeline_mode=pl.Buffered(1) (single-buffered constant operands) is not available on
        # every jax/Pallas version; fall back to default double-buffering.
        return run(single_buffer=False)


# ------------------------------ pure-JAX reference ----------------------------

def _ref_block(x, p, n_head):
    B, T, C = x.shape
    hd = C // n_head

    def ln(z, w, b):
        mu = z.mean(-1, keepdims=True)
        var = ((z - mu) ** 2).mean(-1, keepdims=True)
        return (z - mu) / jnp.sqrt(var + 1e-5) * w + b

    h = ln(x, p["ln1_w"], p["ln1_b"])
    qkv = h @ p["w_attn"] + p["b_attn"]
    q, k, v = jnp.split(qkv, 3, axis=-1)
    q = q.reshape(B, T, n_head, hd).transpose(0, 2, 1, 3)   # (B, nh, T, hd)
    k = k.reshape(B, T, n_head, hd).transpose(0, 2, 1, 3)
    v = v.reshape(B, T, n_head, hd).transpose(0, 2, 1, 3)

    sin = p["sin"][None, :, None, :]   # (1, nh, 1, hd) — position index == head index (as in ref)
    cos = p["cos"][None, :, None, :]

    def rot_half(z):
        z1, z2 = jnp.split(z, 2, axis=-1)
        return jnp.concatenate([-z2, z1], axis=-1)

    q = q * cos + rot_half(q) * sin
    k = k * cos + rot_half(k) * sin

    scores = jnp.einsum("bhtd,bhsd->bhts", q, k) / math.sqrt(hd)
    mask = jnp.tril(jnp.ones((T, T), dtype=bool))
    scores = jnp.where(mask, scores, -jnp.inf)
    att = jax.nn.softmax(scores, axis=-1)
    y = jnp.einsum("bhts,bhsd->bhtd", att, v)
    y = y.transpose(0, 2, 1, 3).reshape(B, T, C)
    x = x + (y @ p["w_proj"] + p["b_proj"])

    h2 = ln(x, p["ln2_w"], p["ln2_b"])
    hfc = h2 @ p["w_fc"] + p["b_fc"]
    hfc = 0.5 * hfc * (1.0 + jnp.tanh(math.sqrt(2.0 / math.pi) * (hfc + 0.044715 * hfc ** 3)))
    return x + (hfc @ p["w_proj2"] + p["b_proj2"])


# ----------------------------------- main --------------------------------------

if __name__ == "__main__":
    B, T, C, n_head = 2, 16, 32, 4
    hd = C // n_head
    tq = 8       # 2 query tiles
    tk = 8       # 2 key blocks -> exercises online softmax + causal block skipping

    key = jax.random.PRNGKey(0)
    ks = jax.random.split(key, 10)
    f32 = jnp.float32

    # rotary tables (indexed by head, per reference semantics)
    inv_freq = 1.0 / (10000.0 ** (jnp.arange(0, hd, 2, dtype=f32) / hd))
    pos = jnp.arange(n_head, dtype=f32)
    freqs = pos[:, None] * inv_freq[None, :]
    emb = jnp.concatenate([freqs, freqs], axis=-1)            # (n_head, hd)

    params = {
        "ln1_w": jnp.ones((1, C), f32),
        "ln1_b": jnp.zeros((1, C), f32),
        "ln2_w": jnp.ones((1, C), f32),
        "ln2_b": jnp.zeros((1, C), f32),
        "w_attn": (jax.random.normal(ks[0], (C, 3 * C)) * 0.02).astype(f32),
        "b_attn": (jax.random.normal(ks[1], (1, 3 * C)) * 0.01).astype(f32),
        "w_proj": (jax.random.normal(ks[2], (C, C)) * 0.02).astype(f32),
        "b_proj": (jax.random.normal(ks[3], (1, C)) * 0.01).astype(f32),
        "w_fc": (jax.random.normal(ks[4], (C, 4 * C)) * 0.02).astype(f32),
        "b_fc": (jax.random.normal(ks[5], (1, 4 * C)) * 0.01).astype(f32),
        "w_proj2": (jax.random.normal(ks[6], (4 * C, C)) * 0.02).astype(f32),
        "b_proj2": (jax.random.normal(ks[7], (1, C)) * 0.01).astype(f32),
        "sin": jnp.sin(emb).astype(f32),
        "cos": jnp.cos(emb).astype(f32),
    }

    x = jax.random.normal(ks[8], (B, T, C), dtype=f32)
    ref = _ref_block(x, params, n_head)

    # f32 matmul path: tight check of the kernel semantics (exact softmax divide, no approx recip)
    out_f32 = jax.block_until_ready(
        gpt2_block(x, params, n_head, tq=tq, tk=tk, compute_dtype=jnp.float32))
    np.testing.assert_allclose(np.asarray(out_f32), np.asarray(ref), rtol=1e-3, atol=1e-3)

    # bf16 matmul operands + f32 accumulation (perf path): loose check
    out_bf16 = jax.block_until_ready(
        gpt2_block(x, params, n_head, tq=tq, tk=tk, compute_dtype=jnp.bfloat16))
    np.testing.assert_allclose(np.asarray(out_bf16), np.asarray(ref), rtol=1e-2, atol=1e-2)

    print("KERNEL_OK")
</pallas_src>

<mosaic_0001>
module attributes {stable_mosaic.version = 11 : i64} {
  func.func @qkv_kernel(%arg0: i32, %arg1: i32, %arg2: memref<1x8x32xf32, #tpu.memory_space<vmem>>, %arg3: memref<1x32xf32, #tpu.memory_space<vmem>>, %arg4: memref<1x32xf32, #tpu.memory_space<vmem>>, %arg5: memref<32x96xf32, #tpu.memory_space<vmem>>, %arg6: memref<1x96xf32, #tpu.memory_space<vmem>>, %arg7: memref<1x8x96xf32, #tpu.memory_space<vmem>>) attributes {dimension_semantics = [#tpu.dimension_semantics<parallel>, #tpu.dimension_semantics<parallel>], iteration_bounds = array<i64: 2, 2>, scalar_prefetch = 0 : i64, scratch_operands = 0 : i64, tpu.core_type = #tpu.core_type<tc>, window_params = [{transform_indices = @transform_0, window_bounds = array<i64: 1, 8, 32>}, {pipeline_mode = #tpu.pipeline_mode<synchronous>, transform_indices = @transform_1, window_bounds = array<i64: 1, 32>}, {pipeline_mode = #tpu.pipeline_mode<synchronous>, transform_indices = @transform_2, window_bounds = array<i64: 1, 32>}, {pipeline_mode = #tpu.pipeline_mode<synchronous>, transform_indices = @transform_3, window_bounds = array<i64: 32, 96>}, {pipeline_mode = #tpu.pipeline_mode<synchronous>, transform_indices = @transform_4, window_bounds = array<i64: 1, 96>}, {transform_indices = @transform_5, window_bounds = array<i64: 1, 8, 96>}]} {
    %c0 = arith.constant 0 : index
    %c0_0 = arith.constant 0 : index
    %c0_1 = arith.constant 0 : index
    %0 = vector.load %arg2[%c0, %c0_0, %c0_1] : memref<1x8x32xf32, #tpu.memory_space<vmem>>, vector<1x8x32xf32>
    %1 = vector.shape_cast %0 : vector<1x8x32xf32> to vector<8x32xf32>
    %c0_2 = arith.constant 0 : index
    %c0_3 = arith.constant 0 : index
    %2 = vector.load %arg3[%c0_2, %c0_3] : memref<1x32xf32, #tpu.memory_space<vmem>>, vector<1x32xf32>
    %c0_4 = arith.constant 0 : index
    %c0_5 = arith.constant 0 : index
    %3 = vector.load %arg4[%c0_4, %c0_5] : memref<1x32xf32, #tpu.memory_space<vmem>>, vector<1x32xf32>
    %cst = arith.constant dense<0.000000e+00> : vector<8xf32>
    %4 = vector.multi_reduction <add>, %1, %cst [1] : vector<8x32xf32> to vector<8xf32>
    %5 = vector.shape_cast %4 : vector<8xf32> to vector<8x1xf32>
    %cst_6 = arith.constant 3.200000e+01 : f32
    %6 = vector.broadcast %cst_6 : f32 to vector<8x1xf32>
    %7 = arith.divf %5, %6 : vector<8x1xf32>
    %8 = vector.broadcast %7 : vector<8x1xf32> to vector<8x32xf32>
    %9 = arith.subf %1, %8 : vector<8x32xf32>
    %10 = arith.mulf %9, %9 : vector<8x32xf32>
    %cst_7 = arith.constant dense<0.000000e+00> : vector<8xf32>
    %11 = vector.multi_reduction <add>, %10, %cst_7 [1] : vector<8x32xf32> to vector<8xf32>
    %12 = vector.shape_cast %11 : vector<8xf32> to vector<8x1xf32>
    %cst_8 = arith.constant 3.200000e+01 : f32
    %13 = vector.broadcast %cst_8 : f32 to vector<8x1xf32>
    %14 = arith.divf %12, %13 : vector<8x1xf32>
    %15 = vector.broadcast %7 : vector<8x1xf32> to vector<8x32xf32>
    %16 = arith.subf %1, %15 : vector<8x32xf32>
    %cst_9 = arith.constant 9.99999974E-6 : f32
    %17 = vector.broadcast %cst_9 : f32 to vector<8x1xf32>
    %18 = arith.addf %14, %17 : vector<8x1xf32>
    %19 = math.rsqrt %18 : vector<8x1xf32>
    %20 = vector.broadcast %19 : vector<8x1xf32> to vector<8x32xf32>
    %21 = arith.mulf %16, %20 : vector<8x32xf32>
    %22 = vector.broadcast %2 : vector<1x32xf32> to vector<8x32xf32>
    %23 = arith.mulf %21, %22 : vector<8x32xf32>
    %24 = vector.broadcast %3 : vector<1x32xf32> to vector<8x32xf32>
    %25 = arith.addf %23, %24 : vector<8x32xf32>
    %c0_10 = arith.constant 0 : index
    %c0_11 = arith.constant 0 : index
    %26 = vector.load %arg5[%c0_10, %c0_11] : memref<32x96xf32, #tpu.memory_space<vmem>>, vector<32x96xf32>
    %cst_12 = arith.constant dense<0.000000e+00> : vector<8x96xf32>
    %27 = tpu.matmul %25, %26, %cst_12 {dimension_numbers = #tpu.dot_dimension_numbers<[1], [0], [0], [1], [0, 0, 1, 1], [], []>} : vector<8x32xf32>, vector<32x96xf32>, vector<8x96xf32> -> vector<8x96xf32>
    %c0_13 = arith.constant 0 : index
    %c0_14 = arith.constant 0 : index
    %28 = vector.load %arg6[%c0_13, %c0_14] : memref<1x96xf32, #tpu.memory_space<vmem>>, vector<1x96xf32>
    %29 = vector.broadcast %28 : vector<1x96xf32> to vector<8x96xf32>
    %30 = arith.addf %27, %29 : vector<8x96xf32>
    %c0_15 = arith.constant 0 : index
    %c0_16 = arith.constant 0 : index
    %c0_17 = arith.constant 0 : index
    %31 = vector.load %arg7[%c0_15, %c0_16, %c0_17] : memref<1x8x96xf32, #tpu.memory_space<vmem>>, vector<1x8x96xf32>
    %32 = vector.shape_cast %31 : vector<1x8x96xf32> to vector<8x96xf32>
    %33 = vector.shape_cast %30 : vector<8x96xf32> to vector<1x8x96xf32>
    tpu.vector_store %arg7[%c0_15, %c0_16, %c0_17], %33 {strides = array<i32>} : memref<1x8x96xf32, #tpu.memory_space<vmem>>, vector<1x8x96xf32>,
    return
  }
  func.func @transform_0(%arg0: i32, %arg1: i32) -> (i32, i32, i32) {
    %c0_i32 = arith.constant 0 : i32
    %c0_i32_0 = arith.constant 0 : i32
    return %arg0, %arg1, %c0_i32 : i32, i32, i32
  }
  func.func @transform_1(%arg0: i32, %arg1: i32) -> (i32, i32) {
    %c0_i32 = arith.constant 0 : i32
    %c0_i32_0 = arith.constant 0 : i32
    %c0_i32_1 = arith.constant 0 : i32
    return %c0_i32, %c0_i32_0 : i32, i32
  }
  func.func @transform_2(%arg0: i32, %arg1: i32) -> (i32, i32) {
    %c0_i32 = arith.constant 0 : i32
    %c0_i32_0 = arith.constant 0 : i32
    %c0_i32_1 = arith.constant 0 : i32
    return %c0_i32, %c0_i32_0 : i32, i32
  }
  func.func @transform_3(%arg0: i32, %arg1: i32) -> (i32, i32) {
    %c0_i32 = arith.constant 0 : i32
    %c0_i32_0 = arith.constant 0 : i32
    %c0_i32_1 = arith.constant 0 : i32
    return %c0_i32, %c0_i32_0 : i32, i32
  }
  func.func @transform_4(%arg0: i32, %arg1: i32) -> (i32, i32) {
    %c0_i32 = arith.constant 0 : i32
    %c0_i32_0 = arith.constant 0 : i32
    %c0_i32_1 = arith.constant 0 : i32
    return %c0_i32, %c0_i32_0 : i32, i32
  }
  func.func @transform_5(%arg0: i32, %arg1: i32) -> (i32, i32, i32) {
    %c0_i32 = arith.constant 0 : i32
    %c0_i32_0 = arith.constant 0 : i32
    return %arg0, %arg1, %c0_i32 : i32, i32, i32
  }
}

module attributes {stable_mosaic.version = 11 : i64} {
  func.func @qkv_kernel(%arg0: i32, %arg1: i32, %arg2: memref<1x8x32xf32, #tpu.memory_space<vmem>>, %arg3: memref<1x32xf32, #tpu.memory_space<vmem>>, %arg4: memref<1x32xf32, #tpu.memory_space<vmem>>, %arg5: memref<32x96xf32, #tpu.memory_space<vmem>>, %arg6: memref<1x96xf32, #tpu.memory_space<vmem>>, %arg7: memref<1x8x96xf32, #tpu.memory_space<vmem>>) attributes {dimension_semantics = [#tpu.dimension_semantics<parallel>, #tpu.dimension_semantics<parallel>], iteration_bounds = array<i64: 2, 2>, scalar_prefetch = 0 : i64, scratch_operands = 0 : i64, tpu.core_type = #tpu.core_type<tc>, window_params = [{transform_indices = @transform_0, window_bounds = array<i64: 1, 8, 32>}, {pipeline_mode = #tpu.pipeline_mode<synchronous>, transform_indices = @transform_1, window_bounds = array<i64: 1, 32>}, {pipeline_mode = #tpu.pipeline_mode<synchronous>, transform_indices = @transform_2, window_bounds = array<i64: 1, 32>}, {pipeline_mode = #tpu.pipeline_mode<synchronous>, transform_indices = @transform_3, window_bounds = array<i64: 32, 96>}, {pipeline_mode = #tpu.pipeline_mode<synchronous>, transform_indices = @transform_4, window_bounds = array<i64: 1, 96>}, {transform_indices = @transform_5, window_bounds = array<i64: 1, 8, 96>}]} {
    %c0 = arith.constant 0 : index
    %c0_0 = arith.constant 0 : index
    %c0_1 = arith.constant 0 : index
    %0 = vector.load %arg2[%c0, %c0_0, %c0_1] : memref<1x8x32xf32, #tpu.memory_space<vmem>>, vector<1x8x32xf32>
    %1 = vector.shape_cast %0 : vector<1x8x32xf32> to vector<8x32xf32>
    %c0_2 = arith.constant 0 : index
    %c0_3 = arith.constant 0 : index
    %2 = vector.load %arg3[%c0_2, %c0_3] : memref<1x32xf32, #tpu.memory_space<vmem>>, vector<1x32xf32>
    %c0_4 = arith.constant 0 : index
    %c0_5 = arith.constant 0 : index
    %3 = vector.load %arg4[%c0_4, %c0_5] : memref<1x32xf32, #tpu.memory_space<vmem>>, vector<1x32xf32>
    %cst = arith.constant dense<0.000000e+00> : vector<8xf32>
    %4 = vector.multi_reduction <add>, %1, %cst [1] : vector<8x32xf32> to vector<8xf32>
    %5 = vector.shape_cast %4 : vector<8xf32> to vector<8x1xf32>
    %cst_6 = arith.constant 3.200000e+01 : f32
    %6 = vector.broadcast %cst_6 : f32 to vector<8x1xf32>
    %7 = arith.divf %5, %6 : vector<8x1xf32>
    %8 = vector.broadcast %7 : vector<8x1xf32> to vector<8x32xf32>
    %9 = arith.subf %1, %8 : vector<8x32xf32>
    %10 = arith.mulf %9, %9 : vector<8x32xf32>
    %cst_7 = arith.constant dense<0.000000e+00> : vector<8xf32>
    %11 = vector.multi_reduction <add>, %10, %cst_7 [1] : vector<8x32xf32> to vector<8xf32>
    %12 = vector.shape_cast %11 : vector<8xf32> to vector<8x1xf32>
    %cst_8 = arith.constant 3.200000e+01 : f32
    %13 = vector.broadcast %cst_8 : f32 to vector<8x1xf32>
    %14 = arith.divf %12, %13 : vector<8x1xf32>
    %15 = vector.broadcast %7 : vector<8x1xf32> to vector<8x32xf32>
    %16 = arith.subf %1, %15 : vector<8x32xf32>
    %cst_9 = arith.constant 9.99999974E-6 : f32
    %17 = vector.broadcast %cst_9 : f32 to vector<8x1xf32>
    %18 = arith.addf %14, %17 : vector<8x1xf32>
    %19 = math.rsqrt %18 : vector<8x1xf32>
    %20 = vector.broadcast %19 : vector<8x1xf32> to vector<8x32xf32>
    %21 = arith.mulf %16, %20 : vector<8x32xf32>
    %22 = vector.broadcast %2 : vector<1x32xf32> to vector<8x32xf32>
    %23 = arith.mulf %21, %22 : vector<8x32xf32>
    %24 = vector.broadcast %3 : vector<1x32xf32> to vector<8x32xf32>
    %25 = arith.addf %23, %24 : vector<8x32xf32>
    %c0_10 = arith.constant 0 : index
    %c0_11 = arith.constant 0 : index
    %26 = vector.load %arg5[%c0_10, %c0_11] : memref<32x96xf32, #tpu.memory_space<vmem>>, vector<32x96xf32>
    %cst_12 = arith.constant dense<0.000000e+00> : vector<8x96xf32>
    %27 = tpu.matmul %25, %26, %cst_12 {dimension_numbers = #tpu.dot_dimension_numbers<[1], [0], [0], [1], [0, 0, 1, 1], [], []>} : vector<8x32xf32>, vector<32x96xf32>, vector<8x96xf32> -> vector<8x96xf32>
    %c0_13 = arith.constant 0 : index
    %c0_14 = arith.constant 0 : index
    %28 = vector.load %arg6[%c0_13, %c0_14] : memref<1x96xf32, #tpu.memory_space<vmem>>, vector<1x96xf32>
    %29 = vector.broadcast %28 : vector<1x96xf32> to vector<8x96xf32>
    %30 = arith.addf %27, %29 : vector<8x96xf32>
    %c0_15 = arith.constant 0 : index
    %c0_16 = arith.constant 0 : index
    %c0_17 = arith.constant 0 : index
    %31 = vector.load %arg7[%c0_15, %c0_16, %c0_17] : memref<1x8x96xf32, #tpu.memory_space<vmem>>, vector<1x8x96xf32>
    %32 = vector.shape_cast %31 : vector<1x8x96xf32> to vector<8x96xf32>
    %33 = vector.shape_cast %30 : vector<8x96xf32> to vector<1x8x96xf32>
    tpu.vector_store %arg7[%c0_15, %c0_16, %c0_17], %33 {strides = array<i32>} : memref<1x8x96xf32, #tpu.memory_space<vmem>>, vector<1x8x96xf32>,
    return
  }
  func.func @transform_0(%arg0: i32, %arg1: i32) -> (i32, i32, i32) {
    %c0_i32 = arith.constant 0 : i32
    %c0_i32_0 = arith.constant 0 : i32
    return %arg0, %arg1, %c0_i32 : i32, i32, i32
  }
  func.func @transform_1(%arg0: i32, %arg1: i32) -> (i32, i32) {
    %c0_i32 = arith.constant 0 : i32
    %c0_i32_0 = arith.constant 0 : i32
    %c0_i32_1 = arith.constant 0 : i32
    return %c0_i32, %c0_i32_0 : i32, i32
  }
  func.func @transform_2(%arg0: i32, %arg1: i32) -> (i32, i32) {
    %c0_i32 = arith.constant 0 : i32
    %c0_i32_0 = arith.constant 0 : i32
    %c0_i32_1 = arith.constant 0 : i32
    return %c0_i32, %c0_i32_0 : i32, i32
  }
  func.func @transform_3(%arg0: i32, %arg1: i32) -> (i32, i32) {
    %c0_i32 = arith.constant 0 : i32
    %c0_i32_0 = arith.constant 0 : i32
    %c0_i32_1 = arith.constant 0 : i32
    return %c0_i32, %c0_i32_0 : i32, i32
  }
  func.func @transform_4(%arg0: i32, %arg1: i32) -> (i32, i32) {
    %c0_i32 = arith.constant 0 : i32
    %c0_i32_0 = arith.constant 0 : i32
    %c0_i32_1 = arith.constant 0 : i32
    return %c0_i32, %c0_i32_0 : i32, i32
  }
  func.func @transform_5(%arg0: i32, %arg1: i32) -> (i32, i32, i32) {
    %c0_i32 = arith.constant 0 : i32
    %c0_i32_0 = arith.constant 0 : i32
    return %arg0, %arg1, %c0_i32 : i32, i32, i32
  }
}

</mosaic_0001>

<llo_original>
// kernel: tpu_custom_call.1
$region0: #{tpu_custom_call.1}
  #allocation0 [shape = 'u32[]', space=smem, size = 0x4, offset = 0x4, fixed_abs, tag = 'smem constant byte address 0x4 - core index']
  #allocation1 [shape = 'u32[144,128]{1,0:T(1,128)}', space=vmem, size = 0x12000, scoped, tag = 'internal scratch']
  %s0 = inlined_call_operand.hbm [shape: f32[2,16,32], index: 0, kind: input, shape index: {}]
  %s1 = inlined_call_operand.vmem [shape: f32[1,32], index: 1, kind: input, shape index: {}]
  %s2 = inlined_call_operand.vmem [shape: f32[1,32], index: 2, kind: input, shape index: {}]
  %s3 = inlined_call_operand.hbm [shape: f32[32,96], index: 3, kind: input, shape index: {}]
  %s4 = inlined_call_operand.vmem [shape: f32[1,96], index: 4, kind: input, shape index: {}]
  %s5 = inlined_call_operand.hbm [shape: f32[2,16,96], index: 5, kind: output, shape index: {}]
  %s6 = sld [smem:[#allocation0]]
  $region61: #{tpu_custom_call.1} parent=0
    _
  %s8 = ssub.s32 1, %s6
  %s9 = scalar_select 0, %s8, %s6
  $region1: #{tpu_custom_call.1} parent=0
    #allocation2 [shape = 'u8[8192]{0}', space=vmem, size = 0x2000, scoped, tag = 'input window, operand 0']
    #allocation3 [shape = 's32[2]{0}', space=sflag, size = 0x8, scoped, tag = 'scoped memory for tpu_custom_call.1']
    #allocation4 [shape = 's32[2]{0}', space=sflag, size = 0x8, scoped, tag = 'scoped memory for tpu_custom_call.1']
    #allocation5 [shape = 'u8[16384]{0}', space=vmem, size = 0x4000, scoped, tag = 'input window, operand 3, single buffered']
    #allocation6 [shape = 's32[1]{0}', space=sflag, size = 0x4, scoped, tag = 'scoped memory for tpu_custom_call.1']
    #allocation7 [shape = 'u8[8192]{0}', space=vmem, size = 0x2000, scoped, tag = 'output window, operand 0']
    %10 = vsyncpa [#allocation3], 0
    %s11 = scalar_lea.sflag [#allocation3], 1
    %12 = vsyncpa %s11, 0
    %13 = vsyncpa [#allocation6], 0
    %14 = vsyncpa [#allocation4], 0
    %s15 = scalar_lea.sflag [#allocation4], 1
    %16 = vsyncpa %s15, 0
    loop: start=0, step=1, limit=6
    $region2: #{tpu_custom_call.1} parent=1 // loop_pre_header
      _
    $region3: #{tpu_custom_call.1} parent=1 // loop_header
      %s18 = sphi 0, %s22
      %p19 = scmp.ge.s32.totalorder %s18, 6
      %s25 = sphi 0, %s37
      %s26 = sphi 0, %s33
      %s27 = sphi 0, %s25
      %s28 = sphi 0, %s26
      %s29 = sphi 0, %s27
      %s30 = sphi 0, %s28
      %s42 = sphi 0, %s44
      %s45 = sphi 0, %s42
      %s46 = sphi 0, %s45
      %s62 = sphi 0, %s46
      %s66 = sphi 0, %s66
      %s68 = sphi 0, %s66
      %s69 = sphi 0, %s68
      %s83 = sphi 0, %s69
      %s87 = sphi 0, %s87
      %s89 = sphi 0, %s87
      %s90 = sphi 0, %s89
      %s104 = sphi 0, %s90
      %s108 = sphi 0, %s108
      %s110 = sphi 0, %s108
      %s111 = sphi 0, %s110
      %s125 = sphi 0, %s111
      %s129 = sphi 0, %s129
      %s131 = sphi 0, %s129
      %s132 = sphi 0, %s131
      %s146 = sphi 0, %s132
      %s154 = sphi 0, %s156
      %s157 = sphi 0, %s154
      %s158 = sphi 0, %s157
      %s174 = sphi 0, %s158
    $region4: #{tpu_custom_call.1} parent=1 // loop_header_branch
      %21 = sbr.rel (%p19) target = $region8
    $region5: #{tpu_custom_call.1} parent=1 // loop_body
      %s23 = ssub.s32 %s18, 1
      %s24 = ssub.s32 %s18, 2
      %s31 = sadd.s32 1, %s26
      %p32 = scmp.ge.s32.totalorder %s31, 2
      %s33 = scalar_select %p32, 0, %s31
      %s34 = sadd.s32 1, %s25
      %s35 = scalar_select %p32, %s34, %s25
      %p36 = scmp.ge.s32.totalorder %s35, 2
      %s37 = scalar_select %p36, 0, %s35
      %s38 = ssub.s32 %s25, %s37
      %s39 = ssub.s32 %s26, %s33
      %s40 = sor.u32 %s38, %s39
      %p41 = scmp.eq.s32.totalorder %s40, 0
      %s43 = sadd.s32 %s42, 1
      %s44 = scalar_select %p41, %s42, %s43
      %p47 = pneg %p41
      %p48 = scmp.eq.s32.totalorder %s18, 3
      %p49 = por %p47, %p48
      %p50 = scmp.ne.s32.totalorder %s42, %s45
      %p51 = scmp.eq.s32.totalorder %s18, 0
      %p52 = por %p50, %p51
      %p53 = scmp.ne.s32.totalorder %s42, %s45
      %p54 = scmp.eq.s32.totalorder %s23, 3
      %p55 = por %p53, %p54
      %p56 = scmp.ne.s32.totalorder %s45, %s46
      %p57 = scmp.eq.s32.totalorder %s23, 0
      %p58 = por %p56, %p57
      %p59 = scmp.ne.s32.totalorder %s45, %s46
      %p60 = scmp.eq.s32.totalorder %s24, 3
      %p61 = por %p59, %p60
      %p63 = scmp.ne.s32.totalorder %s46, %s62
      %p64 = scmp.eq.s32.totalorder %s24, 0
      %p65 = por %p63, %p64
      %s67 = sadd.s32 %s66, 1
      %p70 = scmp.eq.s32.totalorder %s18, 3
      %p71 = scmp.ne.s32.totalorder %s66, %s68
      %p72 = scmp.eq.s32.totalorder %s18, 0
      %p73 = por %p71, %p72
      %p74 = scmp.ne.s32.totalorder %s66, %s68
      %p75 = scmp.eq.s32.totalorder %s23, 3
      %p76 = por %p74, %p75
      %p77 = scmp.ne.s32.totalorder %s68, %s69
      %p78 = scmp.eq.s32.totalorder %s23, 0
      %p79 = por %p77, %p78
      %p80 = scmp.ne.s32.totalorder %s68, %s69
      %p81 = scmp.eq.s32.totalorder %s24, 3
      %p82 = por %p80, %p81
      %p84 = scmp.ne.s32.totalorder %s69, %s83
      %p85 = scmp.eq.s32.totalorder %s24, 0
      %p86 = por %p84, %p85
      %s88 = sadd.s32 %s87, 1
      %p91 = scmp.eq.s32.totalorder %s18, 3
      %p92 = scmp.ne.s32.totalorder %s87, %s89
      %p93 = scmp.eq.s32.totalorder %s18, 0
      %p94 = por %p92, %p93
      %p95 = scmp.ne.s32.totalorder %s87, %s89
      %p96 = scmp.eq.s32.totalorder %s23, 3
      %p97 = por %p95, %p96
      %p98 = scmp.ne.s32.totalorder %s89, %s90
      %p99 = scmp.eq.s32.totalorder %s23, 0
      %p100 = por %p98, %p99
      %p101 = scmp.ne.s32.totalorder %s89, %s90
      %p102 = scmp.eq.s32.totalorder %s24, 3
      %p103 = por %p101, %p102
      %p105 = scmp.ne.s32.totalorder %s90, %s104
      %p106 = scmp.eq.s32.totalorder %s24, 0
      %p107 = por %p105, %p106
      %s109 = sadd.s32 %s108, 1
      %p112 = scmp.eq.s32.totalorder %s18, 3
      %p113 = scmp.ne.s32.totalorder %s108, %s110
      %p114 = scmp.eq.s32.totalorder %s18, 0
      %p115 = por %p113, %p114
      %p116 = scmp.ne.s32.totalorder %s108, %s110
      %p117 = scmp.eq.s32.totalorder %s23, 3
      %p118 = por %p116, %p117
      %p119 = scmp.ne.s32.totalorder %s110, %s111
      %p120 = scmp.eq.s32.totalorder %s23, 0
      %p121 = por %p119, %p120
      %p122 = scmp.ne.s32.totalorder %s110, %s111
      %p123 = scmp.eq.s32.totalorder %s24, 3
      %p124 = por %p122, %p123
      %p126 = scmp.ne.s32.totalorder %s111, %s125
      %p127 = scmp.eq.s32.totalorder %s24, 0
      %p128 = por %p126, %p127
      %s130 = sadd.s32 %s129, 1
      %p133 = scmp.eq.s32.totalorder %s18, 3
      %p134 = scmp.ne.s32.totalorder %s129, %s131
      %p135 = scmp.eq.s32.totalorder %s18, 0
      %p136 = por %p134, %p135
      %p137 = scmp.ne.s32.totalorder %s129, %s131
      %p138 = scmp.eq.s32.totalorder %s23, 3
      %p139 = por %p137, %p138
      %p140 = scmp.ne.s32.totalorder %s131, %s132
      %p141 = scmp.eq.s32.totalorder %s23, 0
      %p142 = por %p140, %p141
      %p143 = scmp.ne.s32.totalorder %s131, %s132
      %p144 = scmp.eq.s32.totalorder %s24, 3
      %p145 = por %p143, %p144
      %p147 = scmp.ne.s32.totalorder %s132, %s146
      %p148 = scmp.eq.s32.totalorder %s24, 0
      %p149 = por %p147, %p148
      %s150 = ssub.s32 %s25, %s37
      %s151 = ssub.s32 %s26, %s33
      %s152 = sor.u32 %s150, %s151
      %p153 = scmp.eq.s32.totalorder %s152, 0
      %s155 = sadd.s32 %s154, 1
      %s156 = scalar_select %p153, %s154, %s155
      %p159 = pneg %p153
      %p160 = scmp.eq.s32.totalorder %s18, 3
      %p161 = por %p159, %p160
      %p162 = scmp.ne.s32.totalorder %s154, %s157
      %p163 = scmp.eq.s32.totalorder %s18, 0
      %p164 = por %p162, %p163
      %p165 = scmp.ne.s32.totalorder %s154, %s157
      %p166 = scmp.eq.s32.totalorder %s23, 3
      %p167 = por %p165, %p166
      %p168 = scmp.ne.s32.totalorder %s157, %s158
      %p169 = scmp.eq.s32.totalorder %s23, 0
      %p170 = por %p168, %p169
      %p171 = scmp.ne.s32.totalorder %s157, %s158
      %p172 = scmp.eq.s32.totalorder %s24, 3
      %p173 = por %p171, %p172
      %p175 = scmp.ne.s32.totalorder %s158, %s174
      %p176 = scmp.eq.s32.totalorder %s24, 0
      %p177 = por %p175, %p176
      %p178 = scmp.le.s32.totalorder 1, %s18
      %p179 = scmp.lt.s32.totalorder %s18, 5
      %p180 = pnand %p178, %p179
      %p181 = pneg %p180
      // Predicated region
      $region9: #{tpu_custom_call.1} parent=5 // pred_check
        _
      $region10: #{tpu_custom_call.1} parent=5 // pred_check_branch
        %183 = sbr.rel (%p180) target = $region12
      $region11: #{tpu_custom_call.1} parent=5 // pred_region
        %s184 = ssub.s32 %s18, 1
        // Predicated region
        $region13: #{tpu_custom_call.1} parent=11 // pred_check
          %p185 = pneg %p79
        $region14: #{tpu_custom_call.1} parent=11 // pred_check_branch
          %187 = sbr.rel (%p185) target = $region16
        $region15: #{tpu_custom_call.1} parent=11 // pred_region
          _
        $region16: #{tpu_custom_call.1} parent=11 // pred_fallthru
          _
        // Predicated region
        $region17: #{tpu_custom_call.1} parent=11 // pred_check
          %p188 = pneg %p100
        $region18: #{tpu_custom_call.1} parent=11 // pred_check_branch
          %190 = sbr.rel (%p188) target = $region20
        $region19: #{tpu_custom_call.1} parent=11 // pred_region
          _
        $region20: #{tpu_custom_call.1} parent=11 // pred_fallthru
          _
        // Predicated region
        $region21: #{tpu_custom_call.1} parent=11 // pred_check
          %p191 = pneg %p121
        $region22: #{tpu_custom_call.1} parent=11 // pred_check_branch
          %193 = sbr.rel (%p191) target = $region24
        $region23: #{tpu_custom_call.1} parent=11 // pred_region
          %s195 = ssub.s32 512, 512
          %196 = vsyncadd [#allocation6], %s195
          %s197 = sshll.u32 [#allocation5], 4
          %s198 = int_to_ptr.vmem [resolvable:$true] %s197
          %203 = dma.hbm_to_vmem [thread:$0]  %s3, 512, %s198, [#allocation6], 128, 128, 8
        $region24: #{tpu_custom_call.1} parent=11 // pred_fallthru
          _
        // Predicated region
        $region25: #{tpu_custom_call.1} parent=11 // pred_check
          %p204 = pneg %p142
        $region26: #{tpu_custom_call.1} parent=11 // pred_check_branch
          %206 = sbr.rel (%p204) target = $region28
        $region27: #{tpu_custom_call.1} parent=11 // pred_region
          _
        $region28: #{tpu_custom_call.1} parent=11 // pred_fallthru
          _
      $region12: #{tpu_custom_call.1} parent=5 // pred_fallthru
        _
      %p207 = scmp.lt.s32.totalorder %s18, 4
      // Predicated region
      $region29: #{tpu_custom_call.1} parent=5 // pred_check
        %p208 = pneg %p207
      $region30: #{tpu_custom_call.1} parent=5 // pred_check_branch
        %210 = sbr.rel (%p208) target = $region32
      $region31: #{tpu_custom_call.1} parent=5 // pred_region
        // Predicated region
        $region33: #{tpu_custom_call.1} parent=31 // pred_check
          %p211 = pneg %p52
        $region34: #{tpu_custom_call.1} parent=31 // pred_check_branch
          %213 = sbr.rel (%p211) target = $region36
        $region35: #{tpu_custom_call.1} parent=31 // pred_region
          %s214 = sand.u32 %s42, 1
          %s215 = scalar_lea.sflag [#allocation3], %s214
          %s216 = sand.u32 %s42, 1
          %s217 = smul.addr %s216, 8
          %s218 = scalar_lea.vmem [#allocation2], %s217
          %s220 = ssub.s32 128, 128
          %221 = vsyncadd %s215, %s220
          %s222 = smul.addr %s25, 2
          %s223 = sadd.s32 %s26, %s222
          %s224 = smul.addr %s223, 128
          %s225 = scalar_lea.hbm %s0, %s224
          %s227 = sshll.u32 %s218, 4
          %s228 = int_to_ptr.vmem [resolvable:$true] %s227
          %230 = dma.hbm_to_vmem [thread:$0]  %s225, 128, %s228, %s215
        $region36: #{tpu_custom_call.1} parent=31 // pred_fallthru
          _
      $region32: #{tpu_custom_call.1} parent=5 // pred_fallthru
        _
      %p231 = scmp.le.s32.totalorder 1, %s18
      %p232 = scmp.lt.s32.totalorder %s18, 5
      %p233 = pnand %p231, %p232
      %p234 = pneg %p233
      // Predicated region
      $region37: #{tpu_custom_call.1} parent=5 // pred_check
        _
      $region38: #{tpu_custom_call.1} parent=5 // pred_check_branch
        %236 = sbr.rel (%p233) target = $region40
      $region39: #{tpu_custom_call.1} parent=5 // pred_region
        %s237 = ssub.s32 %s18, 1
        %s238 = sand.u32 %s45, 1
        %s239 = scalar_lea.sflag [#allocation3], %s238
        %s240 = sand.u32 %s45, 1
        %s241 = smul.addr %s240, 8
        %s242 = scalar_lea.vmem [#allocation2], %s241
        // Predicated region
        $region41: #{tpu_custom_call.1} parent=39 // pred_check
          %p243 = pneg %p58
        $region42: #{tpu_custom_call.1} parent=39 // pred_check_branch
          %245 = sbr.rel (%p243) target = $region44
        $region43: #{tpu_custom_call.1} parent=39 // pred_region
          %246 = dma.done %s239, 128
        $region44: #{tpu_custom_call.1} parent=39 // pred_fallthru
          _
        // Predicated region
        $region45: #{tpu_custom_call.1} parent=39 // pred_check
          %p247 = pneg %p121
        $region46: #{tpu_custom_call.1} parent=39 // pred_check_branch
          %249 = sbr.rel (%p247) target = $region48
        $region47: #{tpu_custom_call.1} parent=39 // pred_region
          %250 = dma.done [#allocation6], 512
        $region48: #{tpu_custom_call.1} parent=39 // pred_fallthru
          _
        %s251 = sand.u32 %s45, 1
        %s252 = scalar_lea.sflag [#allocation3], %s251
        %s253 = sand.u32 %s45, 1
        %s254 = smul.addr %s253, 8
        %s255 = scalar_lea.vmem [#allocation2], %s254
        %p256 = pneg %p58
        %p257 = pneg %p55
        %p258 = pneg %p79
        %p259 = pneg %p76
        %p260 = pneg %p100
        %p261 = pneg %p97
        %p262 = pneg %p121
        %p263 = pneg %p118
        %p264 = pneg %p142
        %p265 = pneg %p139
        %p266 = pneg %p170
        %p267 = pneg %p167
        %s268 = sand.u32 %s157, 1
        %s269 = scalar_lea.sflag [#allocation4], %s268
        %s270 = sand.u32 %s157, 1
        %s271 = smul.addr %s270, 8
        %s272 = scalar_lea.vmem [#allocation7], %s271
        %v273 = vld [vmem:[%s242] sm:$0xff]
        %v274 = vld [vmem:[%s1] sm:$0x1]
        %v275 = vld [vmem:[%s2] sm:$0x1]
        %vm276 = vcmask 261120
        %v277 = vsel %vm276, %v273, 0.0
        %278 = vadd.xlane.f32.xlu0 %v277
        %v279 = vpop.xlane.xlu0 %278
        %v280 = vrcp.pop 32.0
        %v281 = vmul.f32 %v279, %v280
        %v282 = vsub.f32 %v273, %v281
        %v283 = vmul.f32 %v282, %v282
        %v284 = vsel %vm276, %v283, 0.0
        %285 = vadd.xlane.f32.xlu0 %v284
        %v286 = vpop.xlane.xlu0 %285
        %v287 = vmul.f32 %v286, %v280
        %v288 = vadd.f32 %v287, 1e-05
        %v289 = vrsqrt.pop %v288
        %v290 = vmul.f32 %v282, %v289
        %v292 = vlaneseq
        %v293 = vshrl.u32 %v292, 7
        %v294 = vsub.s32 0, %v293
        %v295 = vrot.slane %v274, %v294
        %v297 = vmul.f32 %v290, %v295
        %v299 = vlaneseq
        %v300 = vshrl.u32 %v299, 7
        %v301 = vsub.s32 0, %v300
        %v302 = vrot.slane %v275, %v301
        %v304 = vadd.f32 %v297, %v302
        %v305 = vld [vmem:[#allocation5] sm:$0xff]
        %v306 = vld [vmem:[#allocation5 + $0x8] sm:$0xff]
        %v307 = vld [vmem:[#allocation5 + $0x10] sm:$0xff]
        %v308 = vld [vmem:[#allocation5 + $0x18] sm:$0xff]
        %v309 = vld [vmem:[%s4] sm:$0x1]
        %v311 = vlaneseq
        %v312 = vshrl.u32 %v311, 7
        %v313 = vsub.s32 0, %v312
        %v314 = vrot.slane %v309, %v313
        %v317 = vsel %vm276, %v304, 0
        %319 = vmatprep.subr.mxu0 0.0
        %320 = vmatpush1.msra.mxu0 0.0
        %321 = vmatprep.subr.mxu0 0.0
        %322 = vmatpush1.msra.mxu0 0.0
        %323 = vmatprep.subr.mxu0 0.0
        %324 = vmatpush1.msra.mxu0 0.0
        %325 = vmatprep.subr.mxu0 0.0
        %326 = vmatpush1.msra.mxu0 0.0
        %327 = vmatprep.subr.mxu0 0.0
        %328 = vmatpush1.msra.mxu0 0.0
        %329 = vmatprep.subr.mxu0 0.0
        %330 = vmatpush1.msra.mxu0 0.0
        %331 = vmatprep.subr.mxu0 0.0
        %332 = vmatpush1.msra.mxu0 0.0
        %333 = vmatprep.subr.mxu0 0.0
        %334 = vmatpush1.msra.mxu0 0.0
        %335 = vmatprep.subr.mxu0 0.0
        %336 = vmatpush1.msra.mxu0 0.0
        %337 = vmatprep.subr.mxu0 0.0
        %338 = vmatpush1.msra.mxu0 0.0
        %339 = vmatprep.subr.mxu0 0.0
        %340 = vmatpush1.msra.mxu0 0.0
        %341 = vmatprep.subr.mxu0 0.0
        %342 = vmatpush1.msra.mxu0 0.0
        %343 = vmatprep.subr.mxu0 0.0
        %344 = vmatpush1.msra.mxu0 %v308
        %345 = vmatprep.subr.mxu0 0.0
        %346 = vmatpush1.msra.mxu0 %v307
        %347 = vmatprep.subr.mxu0 0.0
        %348 = vmatpush1.msra.mxu0 %v306
        %349 = vmatprep.subr.mxu0 0.0
        %350 = vmatpush1.msra.mxu0 %v305
        %351 = vmatprep.subr.mxu0 0.0
        %352 = vmatpush2.msra.mxu0 0.0
        %353 = vmatprep.subr.mxu0 0.0
        %354 = vmatpush2.msra.mxu0 0.0
        %355 = vmatprep.subr.mxu0 0.0
        %356 = vmatpush2.msra.mxu0 0.0
        %357 = vmatprep.subr.mxu0 0.0
        %358 = vmatpush2.msra.mxu0 0.0
        %359 = vmatprep.subr.mxu0 0.0
        %360 = vmatpush2.msra.mxu0 0.0
        %361 = vmatprep.subr.mxu0 0.0
        %362 = vmatpush2.msra.mxu0 0.0
        %363 = vmatprep.subr.mxu0 0.0
        %364 = vmatpush2.msra.mxu0 0.0
        %365 = vmatprep.subr.mxu0 0.0
        %366 = vmatpush2.msra.mxu0 0.0
        %367 = vmatprep.subr.mxu0 0.0
        %368 = vmatpush2.msra.mxu0 0.0
        %369 = vmatprep.subr.mxu0 0.0
        %370 = vmatpush2.msra.mxu0 0.0
        %371 = vmatprep.subr.mxu0 0.0
        %372 = vmatpush2.msra.mxu0 0.0
        %373 = vmatprep.subr.mxu0 0.0
        %374 = vmatpush2.msra.mxu0 0.0
        %375 = vmatprep.subr.mxu0 0.0
        %376 = vmatpush2.msra.mxu0 0.0
        %377 = vmatprep.subr.mxu0 0.0
        %378 = vmatpush2.msra.mxu0 0.0
        %379 = vmatprep.subr.mxu0 0.0
        %380 = vmatpush2.msra.mxu0 0.0
        %381 = vmatprep.subr.mxu0 0.0
        %382 = vmatpush2.msra.mxu0 0.0
        %383 = vmatprep.mubr.f32.mxu0 0.0
        %384 = vmatmul.mubr.f32.gmra.mxu0 %v317
        %v385 = vpop.f32.mrf.mxu0
        %v386 = vadd.f32 %v314, %v385
        %v387 = vpop.f32.mrf.mxu0
        %388 = vdwg.mxu0
        %vm389 = vcmask 785408
        %390 = vst.msk [vmem:[%s272] sm:$0xff] %vm389, %v386
        %s391 = sand.u32 %s157, 1
        %s392 = scalar_lea.sflag [#allocation4], %s391
        %s393 = sand.u32 %s157, 1
        %s394 = smul.addr %s393, 8
        %s395 = scalar_lea.vmem [#allocation7], %s394
        // Predicated region
        $region49: #{tpu_custom_call.1} parent=39 // pred_check
          %p396 = pneg %p167
        $region50: #{tpu_custom_call.1} parent=39 // pred_check_branch
          %398 = sbr.rel (%p396) target = $region52
        $region51: #{tpu_custom_call.1} parent=39 // pred_region
          %s400 = ssub.s32 128, 128
          %401 = vsyncadd %s392, %s400
          %s402 = smul.addr %s27, 2
          %s403 = sadd.s32 %s28, %s402
          %s404 = smul.addr %s403, 128
          %s405 = scalar_lea.hbm %s5, %s404
          %s407 = sshll.u32 %s395, 4
          %s408 = int_to_ptr.vmem [resolvable:$true] %s407
          %410 = dma.vmem_to_hbm [thread:$0]  %s408, 128, %s405, %s392
        $region52: #{tpu_custom_call.1} parent=39 // pred_fallthru
          _
      $region40: #{tpu_custom_call.1} parent=5 // pred_fallthru
        _
      %p411 = scmp.le.s32.totalorder 2, %s18
      // Predicated region
      $region53: #{tpu_custom_call.1} parent=5 // pred_check
        %p412 = pneg %p411
      $region54: #{tpu_custom_call.1} parent=5 // pred_check_branch
        %414 = sbr.rel (%p412) target = $region56
      $region55: #{tpu_custom_call.1} parent=5 // pred_region
        %s415 = ssub.s32 %s18, 2
        // Predicated region
        $region57: #{tpu_custom_call.1} parent=55 // pred_check
          %p416 = pneg %p173
        $region58: #{tpu_custom_call.1} parent=55 // pred_check_branch
          %418 = sbr.rel (%p416) target = $region60
        $region59: #{tpu_custom_call.1} parent=55 // pred_region
          %s419 = sand.u32 %s158, 1
          %s420 = scalar_lea.sflag [#allocation4], %s419
          %s421 = sand.u32 %s158, 1
          %s422 = smul.addr %s421, 8
          %s423 = scalar_lea.vmem [#allocation7], %s422
          %424 = dma.done %s420, 128
        $region60: #{tpu_custom_call.1} parent=55 // pred_fallthru
          _
      $region56: #{tpu_custom_call.1} parent=5 // pred_fallthru
        _
    $region6: #{tpu_custom_call.1} parent=1 // loop_footer
      %s22 = sadd.s32 1, %s18
    $region7: #{tpu_custom_call.1} parent=1 // loop_footer_branch
      %17 = sbr.rel target = $region3
    $region8: #{tpu_custom_call.1} parent=1 // loop_exit
      _
    %425 = vsyncpa [#allocation3], 1
    %s426 = scalar_lea.sflag [#allocation3], 1
    %427 = vsyncpa %s426, 1
    %428 = vsyncpa [#allocation6], 1
    %429 = vsyncpa [#allocation4], 1
    %s430 = scalar_lea.sflag [#allocation4], 1
    %431 = vsyncpa %s430, 1

// kernel: tpu_custom_call.1
$region0: #{tpu_custom_call.1}
  #allocation0 [shape = 'u32[]', space=smem, size = 0x4, offset = 0x4, fixed_abs, tag = 'smem constant byte address 0x4 - core index']
  #allocation1 [shape = 'u32[144,128]{1,0:T(1,128)}', space=vmem, size = 0x12000, scoped, tag = 'internal scratch']
  %s0 = inlined_call_operand.hbm [shape: f32[2,16,32], index: 0, kind: input, shape index: {}]
  %s1 = inlined_call_operand.vmem [shape: f32[1,32], index: 1, kind: input, shape index: {}]
  %s2 = inlined_call_operand.vmem [shape: f32[1,32], index: 2, kind: input, shape index: {}]
  %s3 = inlined_call_operand.hbm [shape: f32[32,96], index: 3, kind: input, shape index: {}]
  %s4 = inlined_call_operand.vmem [shape: f32[1,96], index: 4, kind: input, shape index: {}]
  %s5 = inlined_call_operand.hbm [shape: f32[2,16,96], index: 5, kind: output, shape index: {}]
  %s6 = sld [smem:[#allocation0]]
  $region61: #{tpu_custom_call.1} parent=0
    _
  %s8 = ssub.s32 1, %s6
  %s9 = scalar_select 0, %s8, %s6
  $region1: #{tpu_custom_call.1} parent=0
    #allocation2 [shape = 'u8[8192]{0}', space=vmem, size = 0x2000, scoped, tag = 'input window, operand 0']
    #allocation3 [shape = 's32[2]{0}', space=sflag, size = 0x8, scoped, tag = 'scoped memory for tpu_custom_call.1']
    #allocation4 [shape = 's32[2]{0}', space=sflag, size = 0x8, scoped, tag = 'scoped memory for tpu_custom_call.1']
    #allocation5 [shape = 'u8[16384]{0}', space=vmem, size = 0x4000, scoped, tag = 'input window, operand 3, single buffered']
    #allocation6 [shape = 's32[1]{0}', space=sflag, size = 0x4, scoped, tag = 'scoped memory for tpu_custom_call.1']
    #allocation7 [shape = 'u8[8192]{0}', space=vmem, size = 0x2000, scoped, tag = 'output window, operand 0']
    %10 = vsyncpa [#allocation3], 0
    %s11 = scalar_lea.sflag [#allocation3], 1
    %12 = vsyncpa %s11, 0
    %13 = vsyncpa [#allocation6], 0
    %14 = vsyncpa [#allocation4], 0
    %s15 = scalar_lea.sflag [#allocation4], 1
    %16 = vsyncpa %s15, 0
    loop: start=0, step=1, limit=6
    $region2: #{tpu_custom_call.1} parent=1 // loop_pre_header
      _
    $region3: #{tpu_custom_call.1} parent=1 // loop_header
      %s18 = sphi 0, %s22
      %p19 = scmp.ge.s32.totalorder %s18, 6
      %s25 = sphi 0, %s37
      %s26 = sphi 0, %s33
      %s27 = sphi 0, %s25
      %s28 = sphi 0, %s26
      %s29 = sphi 0, %s27
      %s30 = sphi 0, %s28
      %s42 = sphi 0, %s44
      %s45 = sphi 0, %s42
      %s46 = sphi 0, %s45
      %s62 = sphi 0, %s46
      %s66 = sphi 0, %s66
      %s68 = sphi 0, %s66
      %s69 = sphi 0, %s68
      %s83 = sphi 0, %s69
      %s87 = sphi 0, %s87
      %s89 = sphi 0, %s87
      %s90 = sphi 0, %s89
      %s104 = sphi 0, %s90
      %s108 = sphi 0, %s108
      %s110 = sphi 0, %s108
      %s111 = sphi 0, %s110
      %s125 = sphi 0, %s111
      %s129 = sphi 0, %s129
      %s131 = sphi 0, %s129
      %s132 = sphi 0, %s131
      %s146 = sphi 0, %s132
      %s154 = sphi 0, %s156
      %s157 = sphi 0, %s154
      %s158 = sphi 0, %s157
      %s174 = sphi 0, %s158
    $region4: #{tpu_custom_call.1} parent=1 // loop_header_branch
      %21 = sbr.rel (%p19) target = $region8
    $region5: #{tpu_custom_call.1} parent=1 // loop_body
      %s23 = ssub.s32 %s18, 1
      %s24 = ssub.s32 %s18, 2
      %s31 = sadd.s32 1, %s26
      %p32 = scmp.ge.s32.totalorder %s31, 2
      %s33 = scalar_select %p32, 0, %s31
      %s34 = sadd.s32 1, %s25
      %s35 = scalar_select %p32, %s34, %s25
      %p36 = scmp.ge.s32.totalorder %s35, 2
      %s37 = scalar_select %p36, 0, %s35
      %s38 = ssub.s32 %s25, %s37
      %s39 = ssub.s32 %s26, %s33
      %s40 = sor.u32 %s38, %s39
      %p41 = scmp.eq.s32.totalorder %s40, 0
      %s43 = sadd.s32 %s42, 1
      %s44 = scalar_select %p41, %s42, %s43
      %p47 = pneg %p41
      %p48 = scmp.eq.s32.totalorder %s18, 3
      %p49 = por %p47, %p48
      %p50 = scmp.ne.s32.totalorder %s42, %s45
      %p51 = scmp.eq.s32.totalorder %s18, 0
      %p52 = por %p50, %p51
      %p53 = scmp.ne.s32.totalorder %s42, %s45
      %p54 = scmp.eq.s32.totalorder %s23, 3
      %p55 = por %p53, %p54
      %p56 = scmp.ne.s32.totalorder %s45, %s46
      %p57 = scmp.eq.s32.totalorder %s23, 0
      %p58 = por %p56, %p57
      %p59 = scmp.ne.s32.totalorder %s45, %s46
      %p60 = scmp.eq.s32.totalorder %s24, 3
      %p61 = por %p59, %p60
      %p63 = scmp.ne.s32.totalorder %s46, %s62
      %p64 = scmp.eq.s32.totalorder %s24, 0
      %p65 = por %p63, %p64
      %s67 = sadd.s32 %s66, 1
      %p70 = scmp.eq.s32.totalorder %s18, 3
      %p71 = scmp.ne.s32.totalorder %s66, %s68
      %p72 = scmp.eq.s32.totalorder %s18, 0
      %p73 = por %p71, %p72
      %p74 = scmp.ne.s32.totalorder %s66, %s68
      %p75 = scmp.eq.s32.totalorder %s23, 3
      %p76 = por %p74, %p75
      %p77 = scmp.ne.s32.totalorder %s68, %s69
      %p78 = scmp.eq.s32.totalorder %s23, 0
      %p79 = por %p77, %p78
      %p80 = scmp.ne.s32.totalorder %s68, %s69
      %p81 = scmp.eq.s32.totalorder %s24, 3
      %p82 = por %p80, %p81
      %p84 = scmp.ne.s32.totalorder %s69, %s83
      %p85 = scmp.eq.s32.totalorder %s24, 0
      %p86 = por %p84, %p85
      %s88 = sadd.s32 %s87, 1
      %p91 = scmp.eq.s32.totalorder %s18, 3
      %p92 = scmp.ne.s32.totalorder %s87, %s89
      %p93 = scmp.eq.s32.totalorder %s18, 0
      %p94 = por %p92, %p93
      %p95 = scmp.ne.s32.totalorder %s87, %s89
      %p96 = scmp.eq.s32.totalorder %s23, 3
      %p97 = por %p95, %p96
      %p98 = scmp.ne.s32.totalorder %s89, %s90
      %p99 = scmp.eq.s32.totalorder %s23, 0
      %p100 = por %p98, %p99
      %p101 = scmp.ne.s32.totalorder %s89, %s90
      %p102 = scmp.eq.s32.totalorder %s24, 3
      %p103 = por %p101, %p102
      %p105 = scmp.ne.s32.totalorder %s90, %s104
      %p106 = scmp.eq.s32.totalorder %s24, 0
      %p107 = por %p105, %p106
      %s109 = sadd.s32 %s108, 1
      %p112 = scmp.eq.s32.totalorder %s18, 3
      %p113 = scmp.ne.s32.totalorder %s108, %s110
      %p114 = scmp.eq.s32.totalorder %s18, 0
      %p115 = por %p113, %p114
      %p116 = scmp.ne.s32.totalorder %s108, %s110
      %p117 = scmp.eq.s32.totalorder %s23, 3
      %p118 = por %p116, %p117
      %p119 = scmp.ne.s32.totalorder %s110, %s111
      %p120 = scmp.eq.s32.totalorder %s23, 0
      %p121 = por %p119, %p120
      %p122 = scmp.ne.s32.totalorder %s110, %s111
      %p123 = scmp.eq.s32.totalorder %s24, 3
      %p124 = por %p122, %p123
      %p126 = scmp.ne.s32.totalorder %s111, %s125
      %p127 = scmp.eq.s32.totalorder %s24, 0
      %p128 = por %p126, %p127
      %s130 = sadd.s32 %s129, 1
      %p133 = scmp.eq.s32.totalorder %s18, 3
      %p134 = scmp.ne.s32.totalorder %s129, %s131
      %p135 = scmp.eq.s32.totalorder %s18, 0
      %p136 = por %p134, %p135
      %p137 = scmp.ne.s32.totalorder %s129, %s131
      %p138 = scmp.eq.s32.totalorder %s23, 3
      %p139 = por %p137, %p138
      %p140 = scmp.ne.s32.totalorder %s131, %s132
      %p141 = scmp.eq.s32.totalorder %s23, 0
      %p142 = por %p140, %p141
      %p143 = scmp.ne.s32.totalorder %s131, %s132
      %p144 = scmp.eq.s32.totalorder %s24, 3
      %p145 = por %p143, %p144
      %p147 = scmp.ne.s32.totalorder %s132, %s146
      %p148 = scmp.eq.s32.totalorder %s24, 0
      %p149 = por %p147, %p148
      %s150 = ssub.s32 %s25, %s37
      %s151 = ssub.s32 %s26, %s33
      %s152 = sor.u32 %s150, %s151
      %p153 = scmp.eq.s32.totalorder %s152, 0
      %s155 = sadd.s32 %s154, 1
      %s156 = scalar_select %p153, %s154, %s155
      %p159 = pneg %p153
      %p160 = scmp.eq.s32.totalorder %s18, 3
      %p161 = por %p159, %p160
      %p162 = scmp.ne.s32.totalorder %s154, %s157
      %p163 = scmp.eq.s32.totalorder %s18, 0
      %p164 = por %p162, %p163
      %p165 = scmp.ne.s32.totalorder %s154, %s157
      %p166 = scmp.eq.s32.totalorder %s23, 3
      %p167 = por %p165, %p166
      %p168 = scmp.ne.s32.totalorder %s157, %s158
      %p169 = scmp.eq.s32.totalorder %s23, 0
      %p170 = por %p168, %p169
      %p171 = scmp.ne.s32.totalorder %s157, %s158
      %p172 = scmp.eq.s32.totalorder %s24, 3
      %p173 = por %p171, %p172
      %p175 = scmp.ne.s32.totalorder %s158, %s174
      %p176 = scmp.eq.s32.totalorder %s24, 0
      %p177 = por %p175, %p176
      %p178 = scmp.le.s32.totalorder 1, %s18
      %p179 = scmp.lt.s32.totalorder %s18, 5
      %p180 = pnand %p178, %p179
      %p181 = pneg %p180
      // Predicated region
      $region9: #{tpu_custom_call.1} parent=5 // pred_check
        _
      $region10: #{tpu_custom_call.1} parent=5 // pred_check_branch
        %183 = sbr.rel (%p180) target = $region12
      $region11: #{tpu_custom_call.1} parent=5 // pred_region
        %s184 = ssub.s32 %s18, 1
        // Predicated region
        $region13: #{tpu_custom_call.1} parent=11 // pred_check
          %p185 = pneg %p79
        $region14: #{tpu_custom_call.1} parent=11 // pred_check_branch
          %187 = sbr.rel (%p185) target = $region16
        $region15: #{tpu_custom_call.1} parent=11 // pred_region
          _
        $region16: #{tpu_custom_call.1} parent=11 // pred_fallthru
          _
        // Predicated region
        $region17: #{tpu_custom_call.1} parent=11 // pred_check
          %p188 = pneg %p100
        $region18: #{tpu_custom_call.1} parent=11 // pred_check_branch
          %190 = sbr.rel (%p188) target = $region20
        $region19: #{tpu_custom_call.1} parent=11 // pred_region
          _
        $region20: #{tpu_custom_call.1} parent=11 // pred_fallthru
          _
        // Predicated region
        $region21: #{tpu_custom_call.1} parent=11 // pred_check
          %p191 = pneg %p121
        $region22: #{tpu_custom_call.1} parent=11 // pred_check_branch
          %193 = sbr.rel (%p191) target = $region24
        $region23: #{tpu_custom_call.1} parent=11 // pred_region
          %s195 = ssub.s32 512, 512
          %196 = vsyncadd [#allocation6], %s195
          %s197 = sshll.u32 [#allocation5], 4
          %s198 = int_to_ptr.vmem [resolvable:$true] %s197
          %203 = dma.hbm_to_vmem [thread:$0]  %s3, 512, %s198, [#allocation6], 128, 128, 8
        $region24: #{tpu_custom_call.1} parent=11 // pred_fallthru
          _
        // Predicated region
        $region25: #{tpu_custom_call.1} parent=11 // pred_check
          %p204 = pneg %p142
        $region26: #{tpu_custom_call.1} parent=11 // pred_check_branch
          %206 = sbr.rel (%p204) target = $region28
        $region27: #{tpu_custom_call.1} parent=11 // pred_region
          _
        $region28: #{tpu_custom_call.1} parent=11 // pred_fallthru
          _
      $region12: #{tpu_custom_call.1} parent=5 // pred_fallthru
        _
      %p207 = scmp.lt.s32.totalorder %s18, 4
      // Predicated region
      $region29: #{tpu_custom_call.1} parent=5 // pred_check
        %p208 = pneg %p207
      $region30: #{tpu_custom_call.1} parent=5 // pred_check_branch
        %210 = sbr.rel (%p208) target = $region32
      $region31: #{tpu_custom_call.1} parent=5 // pred_region
        // Predicated region
        $region33: #{tpu_custom_call.1} parent=31 // pred_check
          %p211 = pneg %p52
        $region34: #{tpu_custom_call.1} parent=31 // pred_check_branch
          %213 = sbr.rel (%p211) target = $region36
        $region35: #{tpu_custom_call.1} parent=31 // pred_region
          %s214 = sand.u32 %s42, 1
          %s215 = scalar_lea.sflag [#allocation3], %s214
          %s216 = sand.u32 %s42, 1
          %s217 = smul.addr %s216, 8
          %s218 = scalar_lea.vmem [#allocation2], %s217
          %s220 = ssub.s32 128, 128
          %221 = vsyncadd %s215, %s220
          %s222 = smul.addr %s25, 2
          %s223 = sadd.s32 %s26, %s222
          %s224 = smul.addr %s223, 128
          %s225 = scalar_lea.hbm %s0, %s224
          %s227 = sshll.u32 %s218, 4
          %s228 = int_to_ptr.vmem [resolvable:$true] %s227
          %230 = dma.hbm_to_vmem [thread:$0]  %s225, 128, %s228, %s215
        $region36: #{tpu_custom_call.1} parent=31 // pred_fallthru
          _
      $region32: #{tpu_custom_call.1} parent=5 // pred_fallthru
        _
      %p231 = scmp.le.s32.totalorder 1, %s18
      %p232 = scmp.lt.s32.totalorder %s18, 5
      %p233 = pnand %p231, %p232
      %p234 = pneg %p233
      // Predicated region
      $region37: #{tpu_custom_call.1} parent=5 // pred_check
        _
      $region38: #{tpu_custom_call.1} parent=5 // pred_check_branch
        %236 = sbr.rel (%p233) target = $region40
      $region39: #{tpu_custom_call.1} parent=5 // pred_region
        %s237 = ssub.s32 %s18, 1
        %s238 = sand.u32 %s45, 1
        %s239 = scalar_lea.sflag [#allocation3], %s238
        %s240 = sand.u32 %s45, 1
        %s241 = smul.addr %s240, 8
        %s242 = scalar_lea.vmem [#allocation2], %s241
        // Predicated region
        $region41: #{tpu_custom_call.1} parent=39 // pred_check
          %p243 = pneg %p58
        $region42: #{tpu_custom_call.1} parent=39 // pred_check_branch
          %245 = sbr.rel (%p243) target = $region44
        $region43: #{tpu_custom_call.1} parent=39 // pred_region
          %246 = dma.done %s239, 128
        $region44: #{tpu_custom_call.1} parent=39 // pred_fallthru
          _
        // Predicated region
        $region45: #{tpu_custom_call.1} parent=39 // pred_check
          %p247 = pneg %p121
        $region46: #{tpu_custom_call.1} parent=39 // pred_check_branch
          %249 = sbr.rel (%p247) target = $region48
        $region47: #{tpu_custom_call.1} parent=39 // pred_region
          %250 = dma.done [#allocation6], 512
        $region48: #{tpu_custom_call.1} parent=39 // pred_fallthru
          _
        %s251 = sand.u32 %s45, 1
        %s252 = scalar_lea.sflag [#allocation3], %s251
        %s253 = sand.u32 %s45, 1
        %s254 = smul.addr %s253, 8
        %s255 = scalar_lea.vmem [#allocation2], %s254
        %p256 = pneg %p58
        %p257 = pneg %p55
        %p258 = pneg %p79
        %p259 = pneg %p76
        %p260 = pneg %p100
        %p261 = pneg %p97
        %p262 = pneg %p121
        %p263 = pneg %p118
        %p264 = pneg %p142
        %p265 = pneg %p139
        %p266 = pneg %p170
        %p267 = pneg %p167
        %s268 = sand.u32 %s157, 1
        %s269 = scalar_lea.sflag [#allocation4], %s268
        %s270 = sand.u32 %s157, 1
        %s271 = smul.addr %s270, 8
        %s272 = scalar_lea.vmem [#allocation7], %s271
        %v273 = vld [vmem:[%s242] sm:$0xff]
        %v274 = vld [vmem:[%s1] sm:$0x1]
        %v275 = vld [vmem:[%s2] sm:$0x1]
        %vm276 = vcmask 261120
        %v277 = vsel %vm276, %v273, 0.0
        %278 = vadd.xlane.f32.xlu0 %v277
        %v279 = vpop.xlane.xlu0 %278
        %v280 = vrcp.pop 32.0
        %v281 = vmul.f32 %v279, %v280
        %v282 = vsub.f32 %v273, %v281
        %v283 = vmul.f32 %v282, %v282
        %v284 = vsel %vm276, %v283, 0.0
        %285 = vadd.xlane.f32.xlu0 %v284
        %v286 = vpop.xlane.xlu0 %285
        %v287 = vmul.f32 %v286, %v280
        %v288 = vadd.f32 %v287, 1e-05
        %v289 = vrsqrt.pop %v288
        %v290 = vmul.f32 %v282, %v289
        %v292 = vlaneseq
        %v293 = vshrl.u32 %v292, 7
        %v294 = vsub.s32 0, %v293
        %v295 = vrot.slane %v274, %v294
        %v297 = vmul.f32 %v290, %v295
        %v299 = vlaneseq
        %v300 = vshrl.u32 %v299, 7
        %v301 = vsub.s32 0, %v300
        %v302 = vrot.slane %v275, %v301
        %v304 = vadd.f32 %v297, %v302
        %v305 = vld [vmem:[#allocation5] sm:$0xff]
        %v306 = vld [vmem:[#allocation5 + $0x8] sm:$0xff]
        %v307 = vld [vmem:[#allocation5 + $0x10] sm:$0xff]
        %v308 = vld [vmem:[#allocation5 + $0x18] sm:$0xff]
        %v309 = vld [vmem:[%s4] sm:$0x1]
        %v311 = vlaneseq
        %v312 = vshrl.u32 %v311, 7
        %v313 = vsub.s32 0, %v312
        %v314 = vrot.slane %v309, %v313
        %v317 = vsel %vm276, %v304, 0
        %319 = vmatprep.subr.mxu0 0.0
        %320 = vmatpush1.msra.mxu0 0.0
        %321 = vmatprep.subr.mxu0 0.0
        %322 = vmatpush1.msra.mxu0 0.0
        %323 = vmatprep.subr.mxu0 0.0
        %324 = vmatpush1.msra.mxu0 0.0
        %325 = vmatprep.subr.mxu0 0.0
        %326 = vmatpush1.msra.mxu0 0.0
        %327 = vmatprep.subr.mxu0 0.0
        %328 = vmatpush1.msra.mxu0 0.0
        %329 = vmatprep.subr.mxu0 0.0
        %330 = vmatpush1.msra.mxu0 0.0
        %331 = vmatprep.subr.mxu0 0.0
        %332 = vmatpush1.msra.mxu0 0.0
        %333 = vmatprep.subr.mxu0 0.0
        %334 = vmatpush1.msra.mxu0 0.0
        %335 = vmatprep.subr.mxu0 0.0
        %336 = vmatpush1.msra.mxu0 0.0
        %337 = vmatprep.subr.mxu0 0.0
        %338 = vmatpush1.msra.mxu0 0.0
        %339 = vmatprep.subr.mxu0 0.0
        %340 = vmatpush1.msra.mxu0 0.0
        %341 = vmatprep.subr.mxu0 0.0
        %342 = vmatpush1.msra.mxu0 0.0
        %343 = vmatprep.subr.mxu0 0.0
        %344 = vmatpush1.msra.mxu0 %v308
        %345 = vmatprep.subr.mxu0 0.0
        %346 = vmatpush1.msra.mxu0 %v307
        %347 = vmatprep.subr.mxu0 0.0
        %348 = vmatpush1.msra.mxu0 %v306
        %349 = vmatprep.subr.mxu0 0.0
        %350 = vmatpush1.msra.mxu0 %v305
        %351 = vmatprep.subr.mxu0 0.0
        %352 = vmatpush2.msra.mxu0 0.0
        %353 = vmatprep.subr.mxu0 0.0
        %354 = vmatpush2.msra.mxu0 0.0
        %355 = vmatprep.subr.mxu0 0.0
        %356 = vmatpush2.msra.mxu0 0.0
        %357 = vmatprep.subr.mxu0 0.0
        %358 = vmatpush2.msra.mxu0 0.0
        %359 = vmatprep.subr.mxu0 0.0
        %360 = vmatpush2.msra.mxu0 0.0
        %361 = vmatprep.subr.mxu0 0.0
        %362 = vmatpush2.msra.mxu0 0.0
        %363 = vmatprep.subr.mxu0 0.0
        %364 = vmatpush2.msra.mxu0 0.0
        %365 = vmatprep.subr.mxu0 0.0
        %366 = vmatpush2.msra.mxu0 0.0
        %367 = vmatprep.subr.mxu0 0.0
        %368 = vmatpush2.msra.mxu0 0.0
        %369 = vmatprep.subr.mxu0 0.0
        %370 = vmatpush2.msra.mxu0 0.0
        %371 = vmatprep.subr.mxu0 0.0
        %372 = vmatpush2.msra.mxu0 0.0
        %373 = vmatprep.subr.mxu0 0.0
        %374 = vmatpush2.msra.mxu0 0.0
        %375 = vmatprep.subr.mxu0 0.0
        %376 = vmatpush2.msra.mxu0 0.0
        %377 = vmatprep.subr.mxu0 0.0
        %378 = vmatpush2.msra.mxu0 0.0
        %379 = vmatprep.subr.mxu0 0.0
        %380 = vmatpush2.msra.mxu0 0.0
        %381 = vmatprep.subr.mxu0 0.0
        %382 = vmatpush2.msra.mxu0 0.0
        %383 = vmatprep.mubr.f32.mxu0 0.0
        %384 = vmatmul.mubr.f32.gmra.mxu0 %v317
        %v385 = vpop.f32.mrf.mxu0
        %v386 = vadd.f32 %v314, %v385
        %v387 = vpop.f32.mrf.mxu0
        %388 = vdwg.mxu0
        %vm389 = vcmask 785408
        %390 = vst.msk [vmem:[%s272] sm:$0xff] %vm389, %v386
        %s391 = sand.u32 %s157, 1
        %s392 = scalar_lea.sflag [#allocation4], %s391
        %s393 = sand.u32 %s157, 1
        %s394 = smul.addr %s393, 8
        %s395 = scalar_lea.vmem [#allocation7], %s394
        // Predicated region
        $region49: #{tpu_custom_call.1} parent=39 // pred_check
          %p396 = pneg %p167
        $region50: #{tpu_custom_call.1} parent=39 // pred_check_branch
          %398 = sbr.rel (%p396) target = $region52
        $region51: #{tpu_custom_call.1} parent=39 // pred_region
          %s400 = ssub.s32 128, 128
          %401 = vsyncadd %s392, %s400
          %s402 = smul.addr %s27, 2
          %s403 = sadd.s32 %s28, %s402
          %s404 = smul.addr %s403, 128
          %s405 = scalar_lea.hbm %s5, %s404
          %s407 = sshll.u32 %s395, 4
          %s408 = int_to_ptr.vmem [resolvable:$true] %s407
          %410 = dma.vmem_to_hbm [thread:$0]  %s408, 128, %s405, %s392
        $region52: #{tpu_custom_call.1} parent=39 // pred_fallthru
          _
      $region40: #{tpu_custom_call.1} parent=5 // pred_fallthru
        _
      %p411 = scmp.le.s32.totalorder 2, %s18
      // Predicated region
      $region53: #{tpu_custom_call.1} parent=5 // pred_check
        %p412 = pneg %p411
      $region54: #{tpu_custom_call.1} parent=5 // pred_check_branch
        %414 = sbr.rel (%p412) target = $region56
      $region55: #{tpu_custom_call.1} parent=5 // pred_region
        %s415 = ssub.s32 %s18, 2
        // Predicated region
        $region57: #{tpu_custom_call.1} parent=55 // pred_check
          %p416 = pneg %p173
        $region58: #{tpu_custom_call.1} parent=55 // pred_check_branch
          %418 = sbr.rel (%p416) target = $region60
        $region59: #{tpu_custom_call.1} parent=55 // pred_region
          %s419 = sand.u32 %s158, 1
          %s420 = scalar_lea.sflag [#allocation4], %s419
          %s421 = sand.u32 %s158, 1
          %s422 = smul.addr %s421, 8
          %s423 = scalar_lea.vmem [#allocation7], %s422
          %424 = dma.done %s420, 128
        $region60: #{tpu_custom_call.1} parent=55 // pred_fallthru
          _
      $region56: #{tpu_custom_call.1} parent=5 // pred_fallthru
        _
    $region6: #{tpu_custom_call.1} parent=1 // loop_footer
      %s22 = sadd.s32 1, %s18
    $region7: #{tpu_custom_call.1} parent=1 // loop_footer_branch
      %17 = sbr.rel target = $region3
    $region8: #{tpu_custom_call.1} parent=1 // loop_exit
      _
    %425 = vsyncpa [#allocation3], 1
    %s426 = scalar_lea.sflag [#allocation3], 1
    %427 = vsyncpa %s426, 1
    %428 = vsyncpa [#allocation6], 1
    %429 = vsyncpa [#allocation4], 1
    %s430 = scalar_lea.sflag [#allocation4], 1
    %431 = vsyncpa %s430, 1

</llo_original>
